<compile_context>
chip_gen: v6e
topology: v6e:2x2x1
jax: 0.10.0
libtpu: 0.0.40
codegen_flags: <defaults>
</compile_context>

<pallas_src>
import functools

import jax
import jax.numpy as jnp
from jax.experimental import pallas as pl
from jax.experimental.pallas import tpu as pltpu

LANE = 128              # lane width (fast axis)
MAX_SUBLANES = 512      # max block height: 512*128 = 64K points per grid step
MIN_GRID = 4            # keep >= 4 grid steps so v7x's 2 TensorCores both get work
MIN_PALLAS_N = 131072   # below this, fused XLA elementwise beats a pallas_call launch


def k0_feature_kernel(x_ref, o_ref):
    # x_ref: [4, BLOCK, LANE]  (rows: x, y, mu1, mu2) in dense (sublane, lane) tiles
    # o_ref: [BLOCK, LANE]
    d1 = x_ref[0] - x_ref[2]   # x - mu1
    d2 = x_ref[1] - x_ref[3]   # y - mu2
    o_ref[...] = jnp.exp(-2.0 * (d1 * d1 + d2 * d2))


def _k0_ref(x):
    # Pure-JAX reference / small-N fallback (fused XLA elementwise).
    return jnp.exp(
        -2.0 * (x[:, 0:1] - x[:, 2:3]) ** 2 - 2.0 * (x[:, 1:2] - x[:, 3:4]) ** 2
    )


def _round_up(v, m):
    return pl.cdiv(v, m) * m


def _choose_tiling(n):
    """Pick (block_sublanes, grid, padded_rows) for N points (trace-time, n static).

    rows       : number of 128-lane rows, rounded up to a multiple of 8 sublanes.
    block      : sublanes per grid step, multiple of 8, <= MAX_SUBLANES.
    grid       : number of grid steps; >= MIN_GRID when the problem is big enough
                 (v7x megacore), and block is re-balanced so padding waste is
                 < grid*8 rows instead of up to a whole block.
    """
    rows = _round_up(pl.cdiv(n, LANE), 8)
    block = min(MAX_SUBLANES, rows)
    grid = pl.cdiv(rows, block)
    if grid < MIN_GRID and rows >= MIN_GRID * 8:
        grid = min(MIN_GRID, rows // 8)
    block = _round_up(pl.cdiv(rows, grid), 8)
    grid = pl.cdiv(rows, block)
    return block, grid, grid * block


def _k0_pallas_feature_major(xt, n):
    """xt: feature-major [4, N] float32 slab (rows: x, y, mu1, mu2)."""
    block, grid, rows_pad = _choose_tiling(n)
    n_pad = rows_pad * LANE

    if n_pad != n:
        xt = jnp.pad(xt, ((0, 0), (0, n_pad - n)))
    xt = xt.reshape(4, rows_pad, LANE)

    out = pl.pallas_call(
        k0_feature_kernel,
        out_shape=jax.ShapeDtypeStruct((rows_pad, LANE), jnp.float32),
        grid=(grid,),
        in_specs=[pl.BlockSpec((4, block, LANE), lambda i: (0, i, 0))],
        out_specs=pl.BlockSpec((block, LANE), lambda i: (i, 0)),
        compiler_params=pltpu.CompilerParams(
            dimension_semantics=("parallel",),
            allow_input_fusion=[True],
        ),
    )(xt)

    # When n == n_pad the slice is a no-op; otherwise it trims the padded tail.
    return out.reshape(n_pad)[:n].reshape(n, 1)


@jax.jit
def my_feature_feature_major(xt):
    """xt: [4, N] float32 feature-major slab (rows: x, y, mu1, mu2) -> [N, 1]."""
    f, n = xt.shape
    assert f == 4, "expected rows (x, y, mu1, mu2)"
    return _k0_pallas_feature_major(xt.astype(jnp.float32), n)


@functools.partial(jax.jit, static_argnames=("force_pallas",))
def my_feature(x, force_pallas=False):
    """x: [N, 4] float32 with columns (x, y, mu1, mu2). Returns [N, 1] ('k0')."""
    n, f = x.shape
    assert f == 4, "expected columns (x, y, mu1, mu2)"
    x = x.astype(jnp.float32)

    # Small/medium problems: fused XLA elementwise is strictly faster than a
    # pallas_call launch + wrapper repack for this 20 B/point op.
    if n < MIN_PALLAS_N and not force_pallas:
        return _k0_ref(x)

    # Feature-major slab; allow_input_fusion lets XLA fold this transpose/pad
    # into the pallas_call input DMA rather than a separate HBM round trip.
    xt = jnp.transpose(x)
    # TODO(synk): LabelTensor label bookkeeping ('k0') has no array-level
    # equivalent; we just return the plain [N, 1] array.
    return _k0_pallas_feature_major(xt, n)


if __name__ == "__main__":
    key = jax.random.PRNGKey(0)
    k_xy, k_mu = jax.random.split(key)

    def make_input(n):
        xy = jax.random.uniform(k_xy, (n, 2), dtype=jnp.float32)        # x, y in [0, 1]
        mu = jax.random.uniform(
            k_mu, (n, 2), dtype=jnp.float32, minval=-1.0, maxval=1.0
        )                                                                # mu1, mu2 in [-1, 1]
        return jnp.concatenate([xy, mu], axis=1)                         # [N, 4]

    # 1) Moderate, lane-aligned problem forced onto the Pallas path (grid >= 4).
    n = 8192
    x = make_input(n)
    out = jax.block_until_ready(my_feature(x, force_pallas=True))
    assert out.shape == (n, 1) and out.dtype == jnp.float32
    assert jnp.allclose(out, _k0_ref(x), atol=1e-6, rtol=1e-6)

    # 2) Non-aligned problem forced onto the Pallas path (exercises padding).
    n_odd = 6000
    x_odd = make_input(n_odd)
    out_odd = jax.block_until_ready(my_feature(x_odd, force_pallas=True))
    assert out_odd.shape == (n_odd, 1)
    assert jnp.allclose(out_odd, _k0_ref(x_odd), atol=1e-6, rtol=1e-6)

    # 3) Large problem that naturally dispatches to Pallas (N >= MIN_PALLAS_N).
    n_big = 150_000
    x_big = make_input(n_big)
    out_big = jax.block_until_ready(my_feature(x_big))
    assert out_big.shape == (n_big, 1)
    assert jnp.allclose(out_big, _k0_ref(x_big), atol=1e-6, rtol=1e-6)

    # 4) Feature-major entry point (no wrapper transpose at all).
    out_fm = jax.block_until_ready(my_feature_feature_major(jnp.transpose(x)))
    assert jnp.allclose(out_fm, _k0_ref(x), atol=1e-6, rtol=1e-6)

    # 5) Example-sized problem (N=256) takes the fused-XLA fallback path.
    n_small = 256
    x_small = x[:n_small]
    out_small = jax.block_until_ready(my_feature(x_small))
    assert out_small.shape == (n_small, 1)
    assert jnp.allclose(out_small, _k0_ref(x_small), atol=1e-6, rtol=1e-6)

    print("KERNEL_OK")
</pallas_src>

<mosaic_0001>
module attributes {stable_mosaic.version = 11 : i64} {
  func.func @k0_feature_kernel(%arg0: i32, %arg1: memref<4x16x128xf32, #tpu.memory_space<vmem>>, %arg2: memref<16x128xf32, #tpu.memory_space<vmem>>) attributes {dimension_semantics = [#tpu.dimension_semantics<parallel>], iteration_bounds = array<i64: 4>, scalar_prefetch = 0 : i64, scratch_operands = 0 : i64, tpu.core_type = #tpu.core_type<tc>, window_params = [{transform_indices = @transform_0, window_bounds = array<i64: 4, 16, 128>}, {transform_indices = @transform_1, window_bounds = array<i64: 16, 128>}]} {
    %c0 = arith.constant 0 : index
    %c0_0 = arith.constant 0 : index
    %c0_1 = arith.constant 0 : index
    %0 = vector.load %arg1[%c0, %c0_0, %c0_1] : memref<4x16x128xf32, #tpu.memory_space<vmem>>, vector<1x16x128xf32>
    %1 = vector.shape_cast %0 : vector<1x16x128xf32> to vector<16x128xf32>
    %c2 = arith.constant 2 : index
    %c0_2 = arith.constant 0 : index
    %c0_3 = arith.constant 0 : index
    %2 = vector.load %arg1[%c2, %c0_2, %c0_3] : memref<4x16x128xf32, #tpu.memory_space<vmem>>, vector<1x16x128xf32>
    %3 = vector.shape_cast %2 : vector<1x16x128xf32> to vector<16x128xf32>
    %4 = arith.subf %1, %3 : vector<16x128xf32>
    %c1 = arith.constant 1 : index
    %c0_4 = arith.constant 0 : index
    %c0_5 = arith.constant 0 : index
    %5 = vector.load %arg1[%c1, %c0_4, %c0_5] : memref<4x16x128xf32, #tpu.memory_space<vmem>>, vector<1x16x128xf32>
    %6 = vector.shape_cast %5 : vector<1x16x128xf32> to vector<16x128xf32>
    %c3 = arith.constant 3 : index
    %c0_6 = arith.constant 0 : index
    %c0_7 = arith.constant 0 : index
    %7 = vector.load %arg1[%c3, %c0_6, %c0_7] : memref<4x16x128xf32, #tpu.memory_space<vmem>>, vector<1x16x128xf32>
    %8 = vector.shape_cast %7 : vector<1x16x128xf32> to vector<16x128xf32>
    %9 = arith.subf %6, %8 : vector<16x128xf32>
    %10 = arith.mulf %4, %4 : vector<16x128xf32>
    %11 = arith.mulf %9, %9 : vector<16x128xf32>
    %12 = arith.addf %10, %11 : vector<16x128xf32>
    %cst = arith.constant -2.000000e+00 : f32
    %13 = vector.broadcast %cst : f32 to vector<16x128xf32>
    %14 = arith.mulf %13, %12 : vector<16x128xf32>
    %15 = math.exp %14 : vector<16x128xf32>
    %c0_8 = arith.constant 0 : index
    %c0_9 = arith.constant 0 : index
    %16 = vector.load %arg2[%c0_8, %c0_9] : memref<16x128xf32, #tpu.memory_space<vmem>>, vector<16x128xf32>
    tpu.vector_store %arg2[%c0_8, %c0_9], %15 {strides = array<i32>} : memref<16x128xf32, #tpu.memory_space<vmem>>, vector<16x128xf32>,
    return
  }
  func.func @transform_0(%arg0: i32) -> (i32, i32, i32) {
    %c0_i32 = arith.constant 0 : i32
    %c0_i32_0 = arith.constant 0 : i32
    %c0_i32_1 = arith.constant 0 : i32
    return %c0_i32, %arg0, %c0_i32_0 : i32, i32, i32
  }
  func.func @transform_1(%arg0: i32) -> (i32, i32) {
    %c0_i32 = arith.constant 0 : i32
    %c0_i32_0 = arith.constant 0 : i32
    return %arg0, %c0_i32 : i32, i32
  }
}

</mosaic_0001>

<llo_original>
// kernel: my_feature.2
$region0: #{my_feature.2}
  #allocation0 [shape = 'u32[]', space=smem, size = 0x4, offset = 0x4, fixed_abs, tag = 'smem constant byte address 0x4 - core index']
  #allocation1 [shape = 'u32[144,128]{1,0:T(1,128)}', space=vmem, size = 0x12000, scoped, tag = 'internal scratch']
  %s0 = inlined_call_operand.vmem [shape: f32[1,4,64,128], index: 0, kind: input, shape index: {}]
  %s1 = inlined_call_operand.hbm [shape: f32[64,128], index: 1, kind: output, shape index: {}]
  %s2 = sld [smem:[#allocation0]]
  $region37: #{my_feature.2} parent=0
    _
  %s4 = ssub.s32 1, %s2
  %s5 = scalar_select 0, %s4, %s2
  $region1: #{my_feature.2} parent=0
    #allocation2 [shape = 'u8[16384]{0}', space=vmem, size = 0x4000, scoped, tag = 'output window, operand 0']
    #allocation3 [shape = 's32[2]{0}', space=sflag, size = 0x8, scoped, tag = 'scoped memory for my_feature.2']
    %6 = vsyncpa [#allocation3], 0
    %s7 = scalar_lea.sflag [#allocation3], 1
    %8 = vsyncpa %s7, 0
    loop: start=0, step=1, limit=6
    $region2: #{my_feature.2} parent=1 // loop_pre_header
      _
    $region3: #{my_feature.2} parent=1 // loop_header
      %s10 = sphi 0, %s14
      %p11 = scmp.ge.s32.totalorder %s10, 6
      %s20 = sphi 0, %s22
      %s23 = sphi 0, %s20
      %s24 = sphi 0, %s23
      %s40 = sphi 0, %s24
      %s46 = sphi 0, %s48
      %s49 = sphi 0, %s46
      %s50 = sphi 0, %s49
      %s66 = sphi 0, %s50
    $region4: #{my_feature.2} parent=1 // loop_header_branch
      %13 = sbr.rel (%p11) target = $region8
    $region5: #{my_feature.2} parent=1 // loop_body
      %s15 = ssub.s32 %s10, 1
      %s16 = ssub.s32 %s10, 2
      %s17 = sadd.s32 %s10, 1
      %s18 = ssub.s32 %s10, %s17
      %p19 = scmp.eq.s32.totalorder %s18, 0
      %s21 = sadd.s32 %s20, 1
      %s22 = scalar_select %p19, %s20, %s21
      %p25 = pneg %p19
      %p26 = scmp.eq.s32.totalorder %s10, 3
      %p27 = por %p25, %p26
      %p28 = scmp.ne.s32.totalorder %s20, %s23
      %p29 = scmp.eq.s32.totalorder %s10, 0
      %p30 = por %p28, %p29
      %p31 = scmp.ne.s32.totalorder %s20, %s23
      %p32 = scmp.eq.s32.totalorder %s15, 3
      %p33 = por %p31, %p32
      %p34 = scmp.ne.s32.totalorder %s23, %s24
      %p35 = scmp.eq.s32.totalorder %s15, 0
      %p36 = por %p34, %p35
      %p37 = scmp.ne.s32.totalorder %s23, %s24
      %p38 = scmp.eq.s32.totalorder %s16, 3
      %p39 = por %p37, %p38
      %p41 = scmp.ne.s32.totalorder %s24, %s40
      %p42 = scmp.eq.s32.totalorder %s16, 0
      %p43 = por %p41, %p42
      %s44 = ssub.s32 %s10, %s17
      %p45 = scmp.eq.s32.totalorder %s44, 0
      %s47 = sadd.s32 %s46, 1
      %s48 = scalar_select %p45, %s46, %s47
      %p51 = pneg %p45
      %p52 = scmp.eq.s32.totalorder %s10, 3
      %p53 = por %p51, %p52
      %p54 = scmp.ne.s32.totalorder %s46, %s49
      %p55 = scmp.eq.s32.totalorder %s10, 0
      %p56 = por %p54, %p55
      %p57 = scmp.ne.s32.totalorder %s46, %s49
      %p58 = scmp.eq.s32.totalorder %s15, 3
      %p59 = por %p57, %p58
      %p60 = scmp.ne.s32.totalorder %s49, %s50
      %p61 = scmp.eq.s32.totalorder %s15, 0
      %p62 = por %p60, %p61
      %p63 = scmp.ne.s32.totalorder %s49, %s50
      %p64 = scmp.eq.s32.totalorder %s16, 3
      %p65 = por %p63, %p64
      %p67 = scmp.ne.s32.totalorder %s50, %s66
      %p68 = scmp.eq.s32.totalorder %s16, 0
      %p69 = por %p67, %p68
      %p70 = scmp.le.s32.totalorder 1, %s10
      %p71 = scmp.lt.s32.totalorder %s10, 5
      %p72 = pnand %p70, %p71
      %p73 = pneg %p72
      // Predicated region
      $region9: #{my_feature.2} parent=5 // pred_check
        _
      $region10: #{my_feature.2} parent=5 // pred_check_branch
        %75 = sbr.rel (%p72) target = $region12
      $region11: #{my_feature.2} parent=5 // pred_region
        %s76 = ssub.s32 %s10, 1
      $region12: #{my_feature.2} parent=5 // pred_fallthru
        _
      %p77 = scmp.lt.s32.totalorder %s10, 4
      // Predicated region
      $region13: #{my_feature.2} parent=5 // pred_check
        %p78 = pneg %p77
      $region14: #{my_feature.2} parent=5 // pred_check_branch
        %80 = sbr.rel (%p78) target = $region16
      $region15: #{my_feature.2} parent=5 // pred_region
        // Predicated region
        $region17: #{my_feature.2} parent=15 // pred_check
          %p81 = pneg %p30
        $region18: #{my_feature.2} parent=15 // pred_check_branch
          %83 = sbr.rel (%p81) target = $region20
        $region19: #{my_feature.2} parent=15 // pred_region
          %s84 = smul.u32 2, %s10
          %p85 = scmp.lt.s32.totalorder %s84, 7
          %s86 = scalar_select %p85, %s84, 7
          %s87 = smul.addr %s86, 8
          %s88 = scalar_lea.vmem %s0, %s87
          %s89 = smul.u32 2, %s10
        $region20: #{my_feature.2} parent=15 // pred_fallthru
          _
      $region16: #{my_feature.2} parent=5 // pred_fallthru
        _
      %p90 = scmp.le.s32.totalorder 1, %s10
      %p91 = scmp.lt.s32.totalorder %s10, 5
      %p92 = pnand %p90, %p91
      %p93 = pneg %p92
      // Predicated region
      $region21: #{my_feature.2} parent=5 // pred_check
        _
      $region22: #{my_feature.2} parent=5 // pred_check_branch
        %95 = sbr.rel (%p92) target = $region24
      $region23: #{my_feature.2} parent=5 // pred_region
        #allocation4 [shape = 'u8[32768]{0}', space=vmem, size = 0x8000, dematerialized = true, scoped, tag = 'FusionAdapter Buffer %fusion.1 = f32[4,64,128]{2,1,0:T(8,128)} fusion(%param_0.1), kind=kLoop, calls=%fused_computation.1.clone, metadata={op_name="jit(my_feature)/reshape" stack_frame_id=9}']
        %s96 = ssub.s32 %s10, 1
        %s97 = smul.u32 2, %s15
        %p98 = scmp.lt.s32.totalorder %s97, 7
        %s99 = scalar_select %p98, %s97, 7
        %s100 = smul.addr %s99, 8
        %s101 = scalar_lea.vmem %s0, %s100
        %p102 = pneg %p36
        %p103 = pneg %p33
        %p104 = pneg %p62
        %p105 = pneg %p59
        %s106 = sand.u32 %s49, 1
        %s107 = scalar_lea.sflag [#allocation3], %s106
        %s108 = sand.u32 %s49, 1
        %s109 = smul.addr %s108, 16
        %s110 = scalar_lea.vmem [#allocation2], %s109
        %s111 = smul.u32 2, %s15
        %p112 = scmp.lt.s32.totalorder %s111, 7
        %s113 = scalar_select %p112, %s111, 7
        %s114 = smul.addr %s113, 8
        %s115 = scalar_lea.vmem %s0, %s114
        %s116 = smul.u32 2, %s15
        %s117 = smul.u32 2, %s15
        %v118 = vld [vmem:[%s115] sm:$0xff]
        %s120 = ssub.s32 256, 1
        %121 = vst [vmem:[#allocation4] sm:%s120] %v118
        %s122 = scalar_lea.vmem %s115, 8
        %v123 = vld [vmem:[%s122] sm:$0xff]
        %s124 = scalar_lea.vmem [#allocation4], 8
        %s126 = ssub.s32 256, 1
        %127 = vst [vmem:[%s124] sm:%s126] %v123
        %s128 = scalar_lea.vmem %s115, 64
        %v129 = vld [vmem:[%s128] sm:$0xff]
        %s130 = scalar_lea.vmem [#allocation4], 16
        %s132 = ssub.s32 256, 1
        %133 = vst [vmem:[%s130] sm:%s132] %v129
        %s134 = scalar_lea.vmem %s115, 72
        %v135 = vld [vmem:[%s134] sm:$0xff]
        %s136 = scalar_lea.vmem [#allocation4], 24
        %s138 = ssub.s32 256, 1
        %139 = vst [vmem:[%s136] sm:%s138] %v135
        %s140 = scalar_lea.vmem %s115, 128
        %v141 = vld [vmem:[%s140] sm:$0xff]
        %s142 = scalar_lea.vmem [#allocation4], 32
        %s144 = ssub.s32 256, 1
        %145 = vst [vmem:[%s142] sm:%s144] %v141
        %s146 = scalar_lea.vmem %s115, 136
        %v147 = vld [vmem:[%s146] sm:$0xff]
        %s148 = scalar_lea.vmem [#allocation4], 40
        %s150 = ssub.s32 256, 1
        %151 = vst [vmem:[%s148] sm:%s150] %v147
        %s152 = scalar_lea.vmem %s115, 192
        %v153 = vld [vmem:[%s152] sm:$0xff]
        %s154 = scalar_lea.vmem [#allocation4], 48
        %s156 = ssub.s32 256, 1
        %157 = vst [vmem:[%s154] sm:%s156] %v153
        %s158 = scalar_lea.vmem %s115, 200
        %v159 = vld [vmem:[%s158] sm:$0xff]
        %s160 = scalar_lea.vmem [#allocation4], 56
        %s162 = ssub.s32 256, 1
        %163 = vst [vmem:[%s160] sm:%s162] %v159
        %v164 = vld [vmem:[#allocation4] sm:$0xff]
        %v165 = vld [vmem:[#allocation4 + $0x8] sm:$0xff]
        %s166 = scalar_lea.vmem [#allocation4], 32
        %v167 = vld [vmem:[%s166] sm:$0xff]
        %v168 = vld [vmem:[%s166 + $0x8] sm:$0xff]
        %v169 = vsub.f32 %v164, %v167
        %v170 = vsub.f32 %v165, %v168
        %s171 = scalar_lea.vmem [#allocation4], 16
        %v172 = vld [vmem:[%s171] sm:$0xff]
        %v173 = vld [vmem:[%s171 + $0x8] sm:$0xff]
        %s174 = scalar_lea.vmem [#allocation4], 48
        %v175 = vld [vmem:[%s174] sm:$0xff]
        %v176 = vld [vmem:[%s174 + $0x8] sm:$0xff]
        %v177 = vsub.f32 %v172, %v175
        %v178 = vsub.f32 %v173, %v176
        %v179 = vmul.f32 %v169, %v169
        %v180 = vmul.f32 %v170, %v170
        %v181 = vmul.f32 %v177, %v177
        %v182 = vmul.f32 %v178, %v178
        %v183 = vadd.f32 %v179, %v181
        %v184 = vadd.f32 %v180, %v182
        %v185 = vmul.f32 %v183, -2.0
        %v186 = vmul.f32 %v184, -2.0
        %v187 = vmul.f32 %v185, 1.442695
        %v188 = vpow.pop %v187
        %v189 = vmul.f32 %v186, 1.442695
        %v190 = vpow.pop %v189
        %191 = vst [vmem:[%s110] sm:$0xff] %v188
        %192 = vst [vmem:[%s110 + $0x8] sm:$0xff] %v190
        %s193 = sand.u32 %s49, 1
        %s194 = scalar_lea.sflag [#allocation3], %s193
        %s195 = sand.u32 %s49, 1
        %s196 = smul.addr %s195, 16
        %s197 = scalar_lea.vmem [#allocation2], %s196
        // Predicated region
        $region25: #{my_feature.2} parent=23 // pred_check
          %p198 = pneg %p59
        $region26: #{my_feature.2} parent=23 // pred_check_branch
          %200 = sbr.rel (%p198) target = $region28
        $region27: #{my_feature.2} parent=23 // pred_region
          %s201 = smul.u32 2, %s15
          %s203 = ssub.s32 256, 256
          %204 = vsyncadd %s194, %s203
          %s205 = smul.addr %s201, 128
          %s206 = scalar_lea.hbm %s1, %s205
          %s207 = sshll.u32 %s197, 4
          %s208 = int_to_ptr.vmem [resolvable:$true] %s207
          %213 = dma.vmem_to_hbm [thread:$0]  %s208, 256, %s206, %s194, 128, 128, 8
        $region28: #{my_feature.2} parent=23 // pred_fallthru
          _
      $region24: #{my_feature.2} parent=5 // pred_fallthru
        _
      %p214 = scmp.le.s32.totalorder 2, %s10
      // Predicated region
      $region29: #{my_feature.2} parent=5 // pred_check
        %p215 = pneg %p214
      $region30: #{my_feature.2} parent=5 // pred_check_branch
        %217 = sbr.rel (%p215) target = $region32
      $region31: #{my_feature.2} parent=5 // pred_region
        %s218 = ssub.s32 %s10, 2
        // Predicated region
        $region33: #{my_feature.2} parent=31 // pred_check
          %p219 = pneg %p65
        $region34: #{my_feature.2} parent=31 // pred_check_branch
          %221 = sbr.rel (%p219) target = $region36
        $region35: #{my_feature.2} parent=31 // pred_region
          %s222 = sand.u32 %s50, 1
          %s223 = scalar_lea.sflag [#allocation3], %s222
          %s224 = sand.u32 %s50, 1
          %s225 = smul.addr %s224, 16
          %s226 = scalar_lea.vmem [#allocation2], %s225
          %227 = dma.done %s223, 256
        $region36: #{my_feature.2} parent=31 // pred_fallthru
          _
      $region32: #{my_feature.2} parent=5 // pred_fallthru
        _
    $region6: #{my_feature.2} parent=1 // loop_footer
      %s14 = sadd.s32 1, %s10
    $region7: #{my_feature.2} parent=1 // loop_footer_branch
      %9 = sbr.rel target = $region3
    $region8: #{my_feature.2} parent=1 // loop_exit
      _
    %228 = vsyncpa [#allocation3], 1
    %s229 = scalar_lea.sflag [#allocation3], 1
    %230 = vsyncpa %s229, 1

</llo_original>
